<compile_context>
chip_gen: v7x
topology: tpu7x:2x2x1
jax: 0.10.0
libtpu: 0.0.40
codegen_flags: <defaults>
</compile_context>

<pallas_src>
import functools

import jax
import jax.numpy as jnp
from jax.experimental import pallas as pl
from jax.experimental.pallas import tpu as pltpu


# ----------------------------------------------------------------------------
# small helpers
# ----------------------------------------------------------------------------
def _round_up(x, m):
    return ((x + m - 1) // m) * m


def _row_tile(P, target=512):
    """Pick a row tile (multiple of 8) and the padded row count."""
    tm = min(target, _round_up(P, 8))
    return tm, _round_up(P, tm)


def _pick_l_tile(L, target=512):
    """Largest tile of L that is a divisor of L, <= target and a multiple of 8."""
    if L <= target:
        return L
    for t in range(target, 7, -1):
        if L % t == 0 and t % 8 == 0:
            return t
    return L


# ----------------------------------------------------------------------------
# Pallas kernel 1: row-tiled matmul + bias (+ ReLU), lane-dense output
# ----------------------------------------------------------------------------
def _mm_bias_kernel(x_ref, w_ref, b_ref, o_ref, *, relu):
    acc = jnp.dot(x_ref[...], w_ref[...], preferred_element_type=jnp.float32)
    acc = acc + b_ref[...]
    if relu:
        acc = jnp.maximum(acc, 0.0)
    o_ref[...] = acc.astype(o_ref.dtype)


def mm_bias(x, w, b, *, relu):
    """(P, K) @ (K, C) + b, optional ReLU.

    Tiled over P ("parallel"), weights/bias resident, output channels padded to
    a multiple of 128 so stores are lane-dense; padding is sliced off outside.
    """
    P, K = x.shape
    Kw, C = w.shape
    assert K == Kw
    Cp = _round_up(C, 128)
    TM, Pp = _row_tile(P)

    x_p = x if Pp == P else jnp.pad(x, ((0, Pp - P), (0, 0)))
    w_p = w if Cp == C else jnp.pad(w, ((0, 0), (0, Cp - C)))
    b_p = (b if Cp == C else jnp.pad(b, (0, Cp - C))).reshape(1, Cp)

    out = pl.pallas_call(
        functools.partial(_mm_bias_kernel, relu=relu),
        out_shape=jax.ShapeDtypeStruct((Pp, Cp), jnp.float32),
        grid=(Pp // TM,),
        in_specs=[
            pl.BlockSpec((TM, K), lambda i: (i, 0)),
            pl.BlockSpec((K, Cp), lambda i: (0, 0)),
            pl.BlockSpec((1, Cp), lambda i: (0, 0)),
        ],
        out_specs=pl.BlockSpec((TM, Cp), lambda i: (i, 0)),
        compiler_params=pltpu.CompilerParams(
            dimension_semantics=("parallel",)),
    )(x_p, w_p, b_p)
    return out[:P, :C]


# ----------------------------------------------------------------------------
# Pallas kernels 2a/2b: coarse matching (two-pass tiled dual-softmax + argmax)
# ----------------------------------------------------------------------------
def _coarse_colstats_kernel(f0_ref, f1_ref, cmax_ref, csum_ref, *, inv_scale):
    """Running column (axis=0) max / sum-exp over L tiles (online softmax)."""
    l = pl.program_id(1)

    @pl.when(l == 0)
    def _():
        cmax_ref[...] = jnp.full_like(cmax_ref, -jnp.inf)
        csum_ref[...] = jnp.zeros_like(csum_ref)

    f0 = f0_ref[0]                                           # (TL, C)
    f1 = f1_ref[0]                                           # (S, C)
    sim = jax.lax.dot_general(
        f0, f1, (((1,), (1,)), ((), ())),
        preferred_element_type=jnp.float32) * inv_scale      # (TL, S)

    m_old = cmax_ref[0]                                      # (1, S)
    m_new = jnp.maximum(m_old, jnp.max(sim, axis=0, keepdims=True))
    csum_ref[0] = (csum_ref[0] * jnp.exp(m_old - m_new)
                   + jnp.sum(jnp.exp(sim - m_new), axis=0, keepdims=True))
    cmax_ref[0] = m_new


def _coarse_conf_kernel(f0_ref, f1_ref, cmax_ref, csum_ref,
                        conf_ref, j_ref, *, inv_scale):
    """Dual-softmax confidence tile + fused argmax over the S axis."""
    f0 = f0_ref[0]                                           # (TL, C)
    f1 = f1_ref[0]                                           # (S, C)
    sim = jax.lax.dot_general(
        f0, f1, (((1,), (1,)), ((), ())),
        preferred_element_type=jnp.float32) * inv_scale      # (TL, S)

    # row softmax (local to the tile: full S present)
    rmax = jnp.max(sim, axis=1, keepdims=True)
    e_r = jnp.exp(sim - rmax)
    row_soft = e_r * pl.reciprocal(jnp.sum(e_r, axis=1, keepdims=True),
                                   approx=True)
    # column softmax from the pre-computed global column statistics
    col_soft = jnp.exp(sim - cmax_ref[0]) * pl.reciprocal(csum_ref[0],
                                                          approx=True)
    conf = row_soft * col_soft
    conf_ref[0] = conf

    # fused argmax along S (first occurrence of the max)
    S = conf.shape[1]
    col_idx = jax.lax.broadcasted_iota(jnp.int32, conf.shape, 1)
    mx = jnp.max(conf, axis=1, keepdims=True)
    j_ref[0] = jnp.min(jnp.where(conf >= mx, col_idx, S), axis=1,
                       keepdims=True)


def coarse_matching(fc0, fc1, *, temperature=0.1, tile_l=512):
    """Returns (conf (N,L,S), j_ids (N,L)) from a dual-softmax over similarities."""
    N, L, C = fc0.shape
    S = fc1.shape[1]
    inv_scale = 1.0 / (float(C) * temperature)
    TL = _pick_l_tile(L, tile_l)
    n_lt = L // TL

    cparams = pltpu.CompilerParams(
        dimension_semantics=("parallel", "arbitrary"),
        vmem_limit_bytes=64 * 1024 * 1024)

    cmax, csum = pl.pallas_call(
        functools.partial(_coarse_colstats_kernel, inv_scale=inv_scale),
        out_shape=(jax.ShapeDtypeStruct((N, 1, S), jnp.float32),
                   jax.ShapeDtypeStruct((N, 1, S), jnp.float32)),
        grid=(N, n_lt),
        in_specs=[
            pl.BlockSpec((1, TL, C), lambda b, l: (b, l, 0)),
            pl.BlockSpec((1, S, C), lambda b, l: (b, 0, 0)),
        ],
        out_specs=(pl.BlockSpec((1, 1, S), lambda b, l: (b, 0, 0)),
                   pl.BlockSpec((1, 1, S), lambda b, l: (b, 0, 0))),
        compiler_params=cparams,
    )(fc0, fc1)

    conf, j_idx = pl.pallas_call(
        functools.partial(_coarse_conf_kernel, inv_scale=inv_scale),
        out_shape=(jax.ShapeDtypeStruct((N, L, S), jnp.float32),
                   jax.ShapeDtypeStruct((N, L, 1), jnp.int32)),
        grid=(N, n_lt),
        in_specs=[
            pl.BlockSpec((1, TL, C), lambda b, l: (b, l, 0)),
            pl.BlockSpec((1, S, C), lambda b, l: (b, 0, 0)),
            pl.BlockSpec((1, 1, S), lambda b, l: (b, 0, 0)),
            pl.BlockSpec((1, 1, S), lambda b, l: (b, 0, 0)),
        ],
        out_specs=(pl.BlockSpec((1, TL, S), lambda b, l: (b, l, 0)),
                   pl.BlockSpec((1, TL, 1), lambda b, l: (b, l, 0))),
        compiler_params=pltpu.CompilerParams(
            dimension_semantics=("parallel", "parallel"),
            vmem_limit_bytes=64 * 1024 * 1024),
    )(fc0, fc1, cmax, csum)

    return conf, j_idx[..., 0]


# ----------------------------------------------------------------------------
# Pallas kernel 3: fine matching (fused proj-add + correlation + softmax + expectation)
# ----------------------------------------------------------------------------
def _fine_match_kernel(w0_ref, w1_ref, p0_ref, p1_ref, o_ref, *, W, Cf, gx, gy):
    WW = W * W
    c = WW // 2
    inv_sqrt = 1.0 / (float(Cf) ** 0.5)

    p0 = p0_ref[...]                                          # (TM, Cf)
    p1 = p1_ref[...]                                          # (TM, Cf)
    f0c = w0_ref[:, c * Cf:(c + 1) * Cf] + p0                 # window-0 center

    # per-window correlation as WW lane reductions (VPU, no tiny MXU matmul)
    sims = []
    for k in range(WW):
        f1k = w1_ref[:, k * Cf:(k + 1) * Cf] + p1
        sims.append(jnp.sum(f0c * f1k, axis=1, keepdims=True) * inv_sqrt)

    m = sims[0]
    for k in range(1, WW):
        m = jnp.maximum(m, sims[k])
    es = [jnp.exp(s - m) for s in sims]
    denom = es[0]
    for k in range(1, WW):
        denom = denom + es[k]
    inv_d = pl.reciprocal(denom, approx=True)

    ox = jnp.zeros_like(m)
    oy = jnp.zeros_like(m)
    for k in range(WW):
        ox = ox + es[k] * gx[k]
        oy = oy + es[k] * gy[k]
    o_ref[...] = jnp.concatenate([ox * inv_d, oy * inv_d], axis=1)


def fine_matching_expec(win0, win1, proj0, proj1, *, W):
    """win* : (M, W*W*Cf) lane-dense windows, proj* : (M, Cf). Returns (M, 2)."""
    M, WWC = win0.shape
    Cf = proj0.shape[1]
    WW = W * W
    assert WWC == WW * Cf
    r = W // 2
    gx = tuple(float((k % W) - r) / r for k in range(WW))
    gy = tuple(float((k // W) - r) / r for k in range(WW))

    TM, Mp = _row_tile(M)
    pad = (lambda a: a) if Mp == M else (
        lambda a: jnp.pad(a, ((0, Mp - M), (0, 0))))

    out = pl.pallas_call(
        functools.partial(_fine_match_kernel, W=W, Cf=Cf, gx=gx, gy=gy),
        out_shape=jax.ShapeDtypeStruct((Mp, 2), jnp.float32),
        grid=(Mp // TM,),
        in_specs=[
            pl.BlockSpec((TM, WWC), lambda i: (i, 0)),
            pl.BlockSpec((TM, WWC), lambda i: (i, 0)),
            pl.BlockSpec((TM, Cf), lambda i: (i, 0)),
            pl.BlockSpec((TM, Cf), lambda i: (i, 0)),
        ],
        out_specs=pl.BlockSpec((TM, 2), lambda i: (i, 0)),
        compiler_params=pltpu.CompilerParams(
            dimension_semantics=("parallel",)),
    )(pad(win0), pad(win1), pad(proj0), pad(proj1))
    return out[:M]


# ----------------------------------------------------------------------------
# Glue (im2col, window unfold) — plain JAX
# ----------------------------------------------------------------------------
def im2col(x, k, stride, pad):
    """x: (N, H, W, C) NHWC -> (N, Ho, Wo, k*k*C)."""
    N, H, W, C = x.shape
    xp = jnp.pad(x, ((0, 0), (pad, pad), (pad, pad), (0, 0)))
    Ho = (H + 2 * pad - k) // stride + 1
    Wo = (W + 2 * pad - k) // stride + 1
    cols = []
    for di in range(k):
        for dj in range(k):
            cols.append(xp[:, di:di + Ho * stride:stride,
                           dj:dj + Wo * stride:stride, :])
    return jnp.concatenate(cols, axis=-1), Ho, Wo


def backbone(img_nchw, params):
    x = jnp.transpose(img_nchw, (0, 2, 3, 1))          # NCHW -> NHWC
    N = x.shape[0]
    cols1, Hf, Wf = im2col(x, 3, 2, 1)
    Cf = params["b1"].shape[0]
    y1 = mm_bias(cols1.reshape(N * Hf * Wf, -1), params["w1"], params["b1"], relu=True)
    feat_f = y1.reshape(N, Hf, Wf, Cf)                 # fine feats (1/2 res)
    cols2, Hc, Wc = im2col(feat_f, 3, 2, 1)
    Cc = params["b2"].shape[0]
    y2 = mm_bias(cols2.reshape(N * Hc * Wc, -1), params["w2"], params["b2"], relu=True)
    feat_c = y2.reshape(N, Hc, Wc, Cc)                 # coarse feats (1/4 res)
    return feat_c, feat_f


def extract_windows(feat_f, centers_r, centers_c, W):
    """feat_f (N,Hf,Wf,Cf), centers (N,L) -> (N*L, W*W*Cf); zero-padded unfold."""
    N, Hf, Wf, Cf = feat_f.shape
    L = centers_r.shape[1]
    r = W // 2
    fpad = jnp.pad(feat_f, ((0, 0), (r, r), (r, r), (0, 0)))
    offs = jnp.arange(W) - r
    rows = centers_r[:, :, None, None] + r + offs[None, None, :, None]
    cols = centers_c[:, :, None, None] + r + offs[None, None, None, :]
    rows = jnp.broadcast_to(rows, (N, L, W, W))
    cols = jnp.broadcast_to(cols, (N, L, W, W))
    b = jnp.broadcast_to(jnp.arange(N)[:, None, None, None], (N, L, W, W))
    win = fpad[b, rows, cols]                          # (N, L, W, W, Cf)
    return win.reshape(N * L, W * W * Cf)              # lane-dense flat windows


# ----------------------------------------------------------------------------
# Forward pass
# ----------------------------------------------------------------------------
def lgfctr_forward(image0, image1, params, *, window=3, temperature=0.1):
    data = {
        "bs": image0.shape[0],
        "hw0_i": image0.shape[2:],
        "hw1_i": image1.shape[2:],
    }
    # ---- backbone (shared weights for both images) ----
    fc0_map, ff0_map = backbone(image0, params)
    fc1_map, ff1_map = backbone(image1, params)
    N, Hc, Wc, Cc = fc0_map.shape
    _, Hf, Wf, Cf = ff0_map.shape
    data.update({"hw0_c": (Hc, Wc), "hw1_c": (Hc, Wc),
                 "hw0_f": (Hf, Wf), "hw1_f": (Hf, Wf)})

    # ---- n c h w -> n (h w) c ----
    fc0 = fc0_map.reshape(N, Hc * Wc, Cc)
    fc1 = fc1_map.reshape(N, Hc * Wc, Cc)
    L = Hc * Wc

    # ---- coarse matching (Pallas: tiled dual softmax + fused argmax) ----
    conf, j_ids = coarse_matching(fc0, fc1, temperature=temperature)
    data["conf_matrix"] = conf                         # (N, L, L)

    scale_c = image0.shape[2] // Hc
    scale_f = image0.shape[2] // Hf
    stride_f = Hf // Hc

    i_ids = jnp.broadcast_to(jnp.arange(L)[None, :], (N, L))
    i_r, i_c = i_ids // Wc, i_ids % Wc
    j_r, j_c = j_ids // Wc, j_ids % Wc
    mkpts0_c = jnp.stack([i_c, i_r], axis=-1).reshape(N * L, 2) * scale_c
    mkpts1_c = jnp.stack([j_c, j_r], axis=-1).reshape(N * L, 2) * scale_c
    data["mkpts0_c"], data["mkpts1_c"] = mkpts0_c, mkpts1_c

    # ---- fine preprocess: window unfold + coarse->fine projection ----
    win0 = extract_windows(ff0_map, i_r * stride_f, i_c * stride_f, window)
    win1 = extract_windows(ff1_map, j_r * stride_f, j_c * stride_f, window)

    proj0 = mm_bias(fc0.reshape(N * L, Cc), params["wd"], params["bd"], relu=False)
    fc1_sel = fc1[jnp.arange(N)[:, None], j_ids]       # (N, L, Cc)
    proj1 = mm_bias(fc1_sel.reshape(N * L, Cc), params["wd"], params["bd"], relu=False)

    # ---- fine matching (Pallas: fused proj-add + correlation + softmax + E[offset]) ----
    r = window // 2
    expec_f = fine_matching_expec(win0, win1, proj0, proj1, W=window)
    data["expec_f"] = expec_f
    data["mkpts0_f"] = mkpts0_c.astype(jnp.float32)
    data["mkpts1_f"] = mkpts1_c.astype(jnp.float32) + expec_f * (r * scale_f)
    return data


# ----------------------------------------------------------------------------
# Deterministic parameter init + demo
# ----------------------------------------------------------------------------
def init_params(key, cf=16, cc=32):
    k1, k2, k3 = jax.random.split(key, 3)
    return {
        "w1": jax.random.normal(k1, (3 * 3 * 1, cf), jnp.float32) * 0.2,   # conv1
        "b1": jnp.zeros((cf,), jnp.float32),
        "w2": jax.random.normal(k2, (3 * 3 * cf, cc), jnp.float32) * 0.1,  # conv2
        "b2": jnp.zeros((cc,), jnp.float32),
        "wd": jax.random.normal(k3, (cc, cf), jnp.float32) * 0.1,          # coarse->fine proj
        "bd": jnp.zeros((cf,), jnp.float32),
    }


if __name__ == "__main__":
    key = jax.random.PRNGKey(0)
    kp, k0, k1 = jax.random.split(key, 3)
    params = init_params(kp)

    image0 = jax.random.normal(k0, (2, 1, 16, 16), jnp.float32)   # (N, 1, H, W)
    image1 = jax.random.normal(k1, (2, 1, 16, 16), jnp.float32)

    out = lgfctr_forward(image0, image1, params)
    jax.block_until_ready((out["conf_matrix"], out["expec_f"],
                           out["mkpts0_f"], out["mkpts1_f"]))

    assert out["conf_matrix"].shape == (2, 16, 16)
    assert out["expec_f"].shape == (32, 2)
    assert bool(jnp.all(jnp.isfinite(out["conf_matrix"])))
    assert bool(jnp.all(jnp.isfinite(out["mkpts1_f"])))
    print("KERNEL_OK")
</pallas_src>

<mosaic_0001>
module attributes {stable_mosaic.version = 11 : i64} {
  func.func @_mm_bias_kernel(%arg0: i32, %arg1: memref<128x9xf32, #tpu.memory_space<vmem>>, %arg2: memref<9x128xf32, #tpu.memory_space<vmem>>, %arg3: memref<1x128xf32, #tpu.memory_space<vmem>>, %arg4: memref<128x128xf32, #tpu.memory_space<vmem>>) attributes {dimension_semantics = [#tpu.dimension_semantics<parallel>], iteration_bounds = array<i64: 1>, scalar_prefetch = 0 : i64, scratch_operands = 0 : i64, tpu.core_type = #tpu.core_type<tc>, window_params = [{transform_indices = @transform_0, window_bounds = array<i64: 128, 9>}, {pipeline_mode = #tpu.pipeline_mode<synchronous>, transform_indices = @transform_1, window_bounds = array<i64: 9, 128>}, {pipeline_mode = #tpu.pipeline_mode<synchronous>, transform_indices = @transform_2, window_bounds = array<i64: 1, 128>}, {transform_indices = @transform_3, window_bounds = array<i64: 128, 128>}]} {
    %c0 = arith.constant 0 : index
    %c0_0 = arith.constant 0 : index
    %0 = vector.load %arg1[%c0, %c0_0] : memref<128x9xf32, #tpu.memory_space<vmem>>, vector<128x9xf32>
    %c0_1 = arith.constant 0 : index
    %c0_2 = arith.constant 0 : index
    %1 = vector.load %arg2[%c0_1, %c0_2] : memref<9x128xf32, #tpu.memory_space<vmem>>, vector<9x128xf32>
    %cst = arith.constant dense<0.000000e+00> : vector<128x128xf32>
    %2 = tpu.matmul %0, %1, %cst {dimension_numbers = #tpu.dot_dimension_numbers<[1], [0], [0], [1], [0, 0, 1, 1], [], []>} : vector<128x9xf32>, vector<9x128xf32>, vector<128x128xf32> -> vector<128x128xf32>
    %c0_3 = arith.constant 0 : index
    %c0_4 = arith.constant 0 : index
    %3 = vector.load %arg3[%c0_3, %c0_4] : memref<1x128xf32, #tpu.memory_space<vmem>>, vector<1x128xf32>
    %4 = vector.broadcast %3 : vector<1x128xf32> to vector<128x128xf32>
    %5 = arith.addf %2, %4 : vector<128x128xf32>
    %cst_5 = arith.constant 0.000000e+00 : f32
    %6 = vector.broadcast %cst_5 : f32 to vector<128x128xf32>
    %7 = arith.maximumf %5, %6 : vector<128x128xf32>
    %c0_6 = arith.constant 0 : index
    %c0_7 = arith.constant 0 : index
    %8 = vector.load %arg4[%c0_6, %c0_7] : memref<128x128xf32, #tpu.memory_space<vmem>>, vector<128x128xf32>
    tpu.vector_store %arg4[%c0_6, %c0_7], %7 {strides = array<i32>} : memref<128x128xf32, #tpu.memory_space<vmem>>, vector<128x128xf32>,
    return
  }
  func.func @transform_0(%arg0: i32) -> (i32, i32) {
    %c0_i32 = arith.constant 0 : i32
    %c0_i32_0 = arith.constant 0 : i32
    return %arg0, %c0_i32 : i32, i32
  }
  func.func @transform_1(%arg0: i32) -> (i32, i32) {
    %c0_i32 = arith.constant 0 : i32
    %c0_i32_0 = arith.constant 0 : i32
    %c0_i32_1 = arith.constant 0 : i32
    return %c0_i32, %c0_i32_0 : i32, i32
  }
  func.func @transform_2(%arg0: i32) -> (i32, i32) {
    %c0_i32 = arith.constant 0 : i32
    %c0_i32_0 = arith.constant 0 : i32
    %c0_i32_1 = arith.constant 0 : i32
    return %c0_i32, %c0_i32_0 : i32, i32
  }
  func.func @transform_3(%arg0: i32) -> (i32, i32) {
    %c0_i32 = arith.constant 0 : i32
    %c0_i32_0 = arith.constant 0 : i32
    return %arg0, %c0_i32 : i32, i32
  }
}

</mosaic_0001>

<llo_original>
// kernel: tpu_custom_call.1
$region0: #{tpu_custom_call.1}
  #allocation0 [shape = 'u32[]', space=smem, size = 0x4, offset = 0x4, fixed_abs, tag = 'smem constant byte address 0x4 - core index']
  #allocation1 [shape = 'u32[144,128]{1,0:T(1,128)}', space=vmem, size = 0x12000, scoped, tag = 'internal scratch']
  %s0 = inlined_call_operand.vmem [shape: f32[128,9], index: 0, kind: input, shape index: {}]
  %s1 = inlined_call_operand.vmem [shape: f32[9,128], index: 1, kind: input, shape index: {}]
  %s2 = inlined_call_operand.vmem [shape: f32[1,128], index: 2, kind: input, shape index: {}]
  %s3 = inlined_call_operand.hbm [shape: f32[128,128], index: 3, kind: output, shape index: {}]
  %s4 = sld [smem:[#allocation0]]
  $region22: #{tpu_custom_call.1} parent=0
    _
  %s6 = ssub.s32 1, %s4
  %s7 = scalar_select 0, %s6, %s4
  $region1: #{tpu_custom_call.1} parent=0
    #allocation2 [shape = 'u8[65536]{0}', space=vmem, size = 0x10000, scoped, tag = 'output window, operand 0, single buffered']
    #allocation3 [shape = 's32[1]{0}', space=sflag, size = 0x4, scoped, tag = 'scoped memory for tpu_custom_call.1']
    %8 = vsyncpa [#allocation3], 0
    // Predicated region
    $region2: #{tpu_custom_call.1} parent=1 // pred_check
      _
    $region3: #{tpu_custom_call.1} parent=1 // pred_check_branch
      %10 = sbr.rel (0) target = $region5
    $region4: #{tpu_custom_call.1} parent=1 // pred_region
      _
    $region5: #{tpu_custom_call.1} parent=1 // pred_fallthru
      _
    // Predicated region
    $region6: #{tpu_custom_call.1} parent=1 // pred_check
      _
    $region7: #{tpu_custom_call.1} parent=1 // pred_check_branch
      %12 = sbr.rel (0) target = $region9
    $region8: #{tpu_custom_call.1} parent=1 // pred_region
      _
    $region9: #{tpu_custom_call.1} parent=1 // pred_fallthru
      _
    // Predicated region
    $region10: #{tpu_custom_call.1} parent=1 // pred_check
      _
    $region11: #{tpu_custom_call.1} parent=1 // pred_check_branch
      %14 = sbr.rel (0) target = $region13
    $region12: #{tpu_custom_call.1} parent=1 // pred_region
      _
    $region13: #{tpu_custom_call.1} parent=1 // pred_fallthru
      _
    %v15 = vld [vmem:[%s0] sm:$0xff]
    %v16 = vld [vmem:[%s0 + $0x8] sm:$0xff]
    %v17 = vld [vmem:[%s0 + $0x10] sm:$0xff]
    %v18 = vld [vmem:[%s0 + $0x18] sm:$0xff]
    %v19 = vld [vmem:[%s0 + $0x20] sm:$0xff]
    %v20 = vld [vmem:[%s0 + $0x28] sm:$0xff]
    %v21 = vld [vmem:[%s0 + $0x30] sm:$0xff]
    %v22 = vld [vmem:[%s0 + $0x38] sm:$0xff]
    %v23 = vld [vmem:[%s0 + $0x40] sm:$0xff]
    %v24 = vld [vmem:[%s0 + $0x48] sm:$0xff]
    %v25 = vld [vmem:[%s0 + $0x50] sm:$0xff]
    %v26 = vld [vmem:[%s0 + $0x58] sm:$0xff]
    %v27 = vld [vmem:[%s0 + $0x60] sm:$0xff]
    %v28 = vld [vmem:[%s0 + $0x68] sm:$0xff]
    %v29 = vld [vmem:[%s0 + $0x70] sm:$0xff]
    %v30 = vld [vmem:[%s0 + $0x78] sm:$0xff]
    %v31 = vld [vmem:[%s1] sm:$0xff]
    %v32 = vld [vmem:[%s1 + $0x8] sm:$0x1]
    %v33 = vld [vmem:[%s2] sm:$0x1]
    %v35 = vlaneseq
    %v36 = vshrl.u32 %v35, 7
    %v37 = vsub.s32 0, %v36
    %v38 = vrot.slane %v33, %v37
    %vm40 = vcmask 72704
    %v42 = vsel %vm40, %v15, 0
    %v45 = vsel %vm40, %v16, 0
    %v48 = vsel %vm40, %v17, 0
    %v51 = vsel %vm40, %v18, 0
    %v54 = vsel %vm40, %v19, 0
    %v57 = vsel %vm40, %v20, 0
    %v60 = vsel %vm40, %v21, 0
    %v63 = vsel %vm40, %v22, 0
    %v66 = vsel %vm40, %v23, 0
    %v69 = vsel %vm40, %v24, 0
    %v72 = vsel %vm40, %v25, 0
    %v75 = vsel %vm40, %v26, 0
    %v78 = vsel %vm40, %v27, 0
    %v81 = vsel %vm40, %v28, 0
    %v84 = vsel %vm40, %v29, 0
    %v87 = vsel %vm40, %v30, 0
    %vm89 = vcmask 1040384
    %v91 = vsel %vm89, %v32, 0
    %93 = vmatprep.subr.mxu0 0.0
    %94 = vmatpush1.msra.mxu0 %v31
    %95 = vmatprep.subr.mxu0 0.0
    %96 = vmatpush1.msra.mxu0 %v91
    %97 = vmatprep.subr.mxu0 0.0
    %98 = vmatpush1.msra.mxu0 0.0
    %99 = vmatprep.subr.mxu0 0.0
    %100 = vmatpush1.msra.mxu0 0.0
    %101 = vmatprep.subr.mxu0 0.0
    %102 = vmatpush1.msra.mxu0 0.0
    %103 = vmatprep.subr.mxu0 0.0
    %104 = vmatpush1.msra.mxu0 0.0
    %105 = vmatprep.subr.mxu0 0.0
    %106 = vmatpush1.msra.mxu0 0.0
    %107 = vmatprep.subr.mxu0 0.0
    %108 = vmatpush1.msra.mxu0 0.0
    %109 = vmatprep.subr.mxu0 0.0
    %110 = vmatpush1.msra.mxu0 0.0
    %111 = vmatprep.subr.mxu0 0.0
    %112 = vmatpush1.msra.mxu0 0.0
    %113 = vmatprep.subr.mxu0 0.0
    %114 = vmatpush1.msra.mxu0 0.0
    %115 = vmatprep.subr.mxu0 0.0
    %116 = vmatpush1.msra.mxu0 0.0
    %117 = vmatprep.subr.mxu0 0.0
    %118 = vmatpush1.msra.mxu0 0.0
    %119 = vmatprep.subr.mxu0 0.0
    %120 = vmatpush1.msra.mxu0 0.0
    %121 = vmatprep.subr.mxu0 0.0
    %122 = vmatpush1.msra.mxu0 0.0
    %123 = vmatprep.subr.mxu0 0.0
    %124 = vmatpush1.msra.mxu0 0.0
    %125 = vmatprep.subr.mxu0 0.0
    %126 = vmatpush1.msra.mxu0 0.0
    %127 = vmatprep.subr.mxu0 0.0
    %128 = vmatpush1.msra.mxu0 0.0
    %129 = vmatprep.subr.mxu0 0.0
    %130 = vmatpush1.msra.mxu0 0.0
    %131 = vmatprep.subr.mxu0 0.0
    %132 = vmatpush1.msra.mxu0 0.0
    %133 = vmatprep.subr.mxu0 0.0
    %134 = vmatpush1.msra.mxu0 0.0
    %135 = vmatprep.subr.mxu0 0.0
    %136 = vmatpush1.msra.mxu0 0.0
    %137 = vmatprep.subr.mxu0 0.0
    %138 = vmatpush1.msra.mxu0 0.0
    %139 = vmatprep.subr.mxu0 0.0
    %140 = vmatpush1.msra.mxu0 0.0
    %141 = vmatprep.subr.mxu0 0.0
    %142 = vmatpush1.msra.mxu0 0.0
    %143 = vmatprep.subr.mxu0 0.0
    %144 = vmatpush1.msra.mxu0 0.0
    %145 = vmatprep.subr.mxu0 0.0
    %146 = vmatpush1.msra.mxu0 0.0
    %147 = vmatprep.subr.mxu0 0.0
    %148 = vmatpush1.msra.mxu0 0.0
    %149 = vmatprep.subr.mxu0 0.0
    %150 = vmatpush1.msra.mxu0 0.0
    %151 = vmatprep.subr.mxu0 0.0
    %152 = vmatpush1.msra.mxu0 0.0
    %153 = vmatprep.subr.mxu0 0.0
    %154 = vmatpush1.msra.mxu0 0.0
    %155 = vmatprep.subr.mxu0 0.0
    %156 = vmatpush1.msra.mxu0 0.0
    %157 = vmatprep.mubr.f32.mxu0 0.0
    %158 = vmatmul.mubr.f32.gmra.mrb[0].mxu0 %v42
    %v159 = vpop.f32.mrb[0].mxu0
    %v160 = vadd.f32 %v38, %v159
    %v161 = vpop.f32.mrb[0].mxu0
    %162 = vmatprep.mubr.f32.mxu0 0.0
    %163 = vmatmul.mubr.f32.gmra.mrb[0].mxu0 %v45
    %v164 = vpop.f32.mrb[0].mxu0
    %v165 = vadd.f32 %v38, %v164
    %v166 = vpop.f32.mrb[0].mxu0
    %167 = vmatprep.mubr.f32.mxu0 0.0
    %168 = vmatmul.mubr.f32.gmra.mrb[0].mxu0 %v48
    %v169 = vpop.f32.mrb[0].mxu0
    %v170 = vadd.f32 %v38, %v169
    %v171 = vpop.f32.mrb[0].mxu0
    %172 = vmatprep.mubr.f32.mxu0 0.0
    %173 = vmatmul.mubr.f32.gmra.mrb[0].mxu0 %v51
    %v174 = vpop.f32.mrb[0].mxu0
    %v175 = vadd.f32 %v38, %v174
    %v176 = vpop.f32.mrb[0].mxu0
    %177 = vmatprep.mubr.f32.mxu0 0.0
    %178 = vmatmul.mubr.f32.gmra.mrb[0].mxu0 %v54
    %v179 = vpop.f32.mrb[0].mxu0
    %v180 = vadd.f32 %v38, %v179
    %v181 = vpop.f32.mrb[0].mxu0
    %182 = vmatprep.mubr.f32.mxu0 0.0
    %183 = vmatmul.mubr.f32.gmra.mrb[0].mxu0 %v57
    %v184 = vpop.f32.mrb[0].mxu0
    %v185 = vadd.f32 %v38, %v184
    %v186 = vpop.f32.mrb[0].mxu0
    %187 = vmatprep.mubr.f32.mxu0 0.0
    %188 = vmatmul.mubr.f32.gmra.mrb[0].mxu0 %v60
    %v189 = vpop.f32.mrb[0].mxu0
    %v190 = vadd.f32 %v38, %v189
    %v191 = vpop.f32.mrb[0].mxu0
    %192 = vmatprep.mubr.f32.mxu0 0.0
    %193 = vmatmul.mubr.f32.gmra.mrb[0].mxu0 %v63
    %v194 = vpop.f32.mrb[0].mxu0
    %v195 = vadd.f32 %v38, %v194
    %v196 = vpop.f32.mrb[0].mxu0
    %197 = vmatprep.mubr.f32.mxu0 0.0
    %198 = vmatmul.mubr.f32.gmra.mrb[0].mxu0 %v66
    %v199 = vpop.f32.mrb[0].mxu0
    %v200 = vadd.f32 %v38, %v199
    %v201 = vpop.f32.mrb[0].mxu0
    %202 = vmatprep.mubr.f32.mxu0 0.0
    %203 = vmatmul.mubr.f32.gmra.mrb[0].mxu0 %v69
    %v204 = vpop.f32.mrb[0].mxu0
    %v205 = vadd.f32 %v38, %v204
    %v206 = vpop.f32.mrb[0].mxu0
    %207 = vmatprep.mubr.f32.mxu0 0.0
    %208 = vmatmul.mubr.f32.gmra.mrb[0].mxu0 %v72
    %v209 = vpop.f32.mrb[0].mxu0
    %v210 = vadd.f32 %v38, %v209
    %v211 = vpop.f32.mrb[0].mxu0
    %212 = vmatprep.mubr.f32.mxu0 0.0
    %213 = vmatmul.mubr.f32.gmra.mrb[0].mxu0 %v75
    %v214 = vpop.f32.mrb[0].mxu0
    %v215 = vadd.f32 %v38, %v214
    %v216 = vpop.f32.mrb[0].mxu0
    %217 = vmatprep.mubr.f32.mxu0 0.0
    %218 = vmatmul.mubr.f32.gmra.mrb[0].mxu0 %v78
    %v219 = vpop.f32.mrb[0].mxu0
    %v220 = vadd.f32 %v38, %v219
    %v221 = vpop.f32.mrb[0].mxu0
    %222 = vmatprep.mubr.f32.mxu0 0.0
    %223 = vmatmul.mubr.f32.gmra.mrb[0].mxu0 %v81
    %v224 = vpop.f32.mrb[0].mxu0
    %v225 = vadd.f32 %v38, %v224
    %v226 = vpop.f32.mrb[0].mxu0
    %227 = vmatprep.mubr.f32.mxu0 0.0
    %228 = vmatmul.mubr.f32.gmra.mrb[0].mxu0 %v84
    %v229 = vpop.f32.mrb[0].mxu0
    %v230 = vadd.f32 %v38, %v229
    %v231 = vpop.f32.mrb[0].mxu0
    %232 = vmatprep.mubr.f32.mxu0 0.0
    %233 = vmatmul.mubr.f32.gmra.mrb[0].mxu0 %v87
    %v234 = vpop.f32.mrb[0].mxu0
    %v235 = vadd.f32 %v38, %v234
    %v236 = vpop.f32.mrb[0].mxu0
    %237 = vdwg.mxu0
    %v238 = vmax.f32 %v160, 0.0
    %v239 = vmax.f32 %v165, 0.0
    %v240 = vmax.f32 %v170, 0.0
    %v241 = vmax.f32 %v175, 0.0
    %v242 = vmax.f32 %v180, 0.0
    %v243 = vmax.f32 %v185, 0.0
    %v244 = vmax.f32 %v190, 0.0
    %v245 = vmax.f32 %v195, 0.0
    %v246 = vmax.f32 %v200, 0.0
    %v247 = vmax.f32 %v205, 0.0
    %v248 = vmax.f32 %v210, 0.0
    %v249 = vmax.f32 %v215, 0.0
    %v250 = vmax.f32 %v220, 0.0
    %v251 = vmax.f32 %v225, 0.0
    %v252 = vmax.f32 %v230, 0.0
    %v253 = vmax.f32 %v235, 0.0
    %254 = vst [vmem:[#allocation2] sm:$0xff] %v238
    %255 = vst [vmem:[#allocation2 + $0x8] sm:$0xff] %v239
    %256 = vst [vmem:[#allocation2 + $0x10] sm:$0xff] %v240
    %257 = vst [vmem:[#allocation2 + $0x18] sm:$0xff] %v241
    %258 = vst [vmem:[#allocation2 + $0x20] sm:$0xff] %v242
    %259 = vst [vmem:[#allocation2 + $0x28] sm:$0xff] %v243
    %260 = vst [vmem:[#allocation2 + $0x30] sm:$0xff] %v244
    %261 = vst [vmem:[#allocation2 + $0x38] sm:$0xff] %v245
    %262 = vst [vmem:[#allocation2 + $0x40] sm:$0xff] %v246
    %263 = vst [vmem:[#allocation2 + $0x48] sm:$0xff] %v247
    %264 = vst [vmem:[#allocation2 + $0x50] sm:$0xff] %v248
    %265 = vst [vmem:[#allocation2 + $0x58] sm:$0xff] %v249
    %266 = vst [vmem:[#allocation2 + $0x60] sm:$0xff] %v250
    %267 = vst [vmem:[#allocation2 + $0x68] sm:$0xff] %v251
    %268 = vst [vmem:[#allocation2 + $0x70] sm:$0xff] %v252
    %269 = vst [vmem:[#allocation2 + $0x78] sm:$0xff] %v253
    // Predicated region
    $region14: #{tpu_custom_call.1} parent=1 // pred_check
      _
    $region15: #{tpu_custom_call.1} parent=1 // pred_check_branch
      %271 = sbr.rel (0) target = $region17
    $region16: #{tpu_custom_call.1} parent=1 // pred_region
      %s273 = ssub.s32 2048, 2048
      %274 = vsyncadd [#allocation3], %s273
      %s275 = sshll.u32 [#allocation2], 4
      %s276 = int_to_ptr.vmem [resolvable:$true] %s275
      %281 = dma.vmem_to_hbm [thread:$0]  %s276, 2048, %s3, [#allocation3], 128, 128, 8
    $region17: #{tpu_custom_call.1} parent=1 // pred_fallthru
      _
    // Predicated region
    $region18: #{tpu_custom_call.1} parent=1 // pred_check
      _
    $region19: #{tpu_custom_call.1} parent=1 // pred_check_branch
      %283 = sbr.rel (0) target = $region21
    $region20: #{tpu_custom_call.1} parent=1 // pred_region
      %284 = dma.done [#allocation3], 2048
    $region21: #{tpu_custom_call.1} parent=1 // pred_fallthru
      _
    %285 = vsyncpa [#allocation3], 1

</llo_original>
